<compile_context>
chip_gen: v5e
topology: v5e:2x2
jax: 0.10.0
libtpu: 0.0.40
codegen_flags: <defaults>
</compile_context>

<pallas_src>
import functools
import math

import jax
import jax.numpy as jnp
from jax.experimental import pallas as pl
from jax.experimental.pallas import tpu as pltpu

EPS = 1e-6  # GEM['eps'], shared by the GeM clamp and both L2N layers


# ------------------------------ small helpers ------------------------------ #

def _round_up(v, m):
    return ((v + m - 1) // m) * m


def _sublane_multiple(itemsize):
    return {1: 32, 2: 16, 4: 8}.get(itemsize, 8)


def _vmem_capacity_bytes():
    """Physical VMEM per TensorCore; falls back to 128 MiB if the query fails."""
    try:
        cap = int(pltpu.get_tpu_info().vmem_capacity_bytes)
        return min(max(cap, 32 << 20), 256 << 20)
    except Exception:
        return 128 << 20


def _choose_tiles(N, C, HW, x_itemsize, Dp, usable_bytes, w_resident_bytes):
    """Pick (tile_n, hw_tile) so the double-buffered blocks fit the VMEM budget."""
    sub = _sublane_multiple(x_itemsize)
    c_sub = _round_up(C, sub)       # x-block C padding (sublane axis)
    c_lane = _round_up(C, 128)      # acc C padding (lane axis)

    def blocks_bytes(tn, ht):
        x_blk = tn * c_sub * _round_up(ht, 128) * x_itemsize
        o_blk = _round_up(tn, 8) * Dp * 4
        acc_blk = _round_up(tn, 8) * c_lane * 4
        return 2 * (x_blk + o_blk) + acc_blk + w_resident_bytes

    # tile_n: divisor of N that is a multiple of 8 (or N itself).  Prefer >=2
    # batch tiles (feeds both v7x TensorCores); larger tiles first within class.
    cands = {N} | {t for t in range(8, N + 1, 8) if N % t == 0}
    multi = sorted((t for t in cands if N // t >= 2), reverse=True)
    single = sorted((t for t in cands if N // t < 2), reverse=True)
    n_cands = multi + single

    # hw_tile: full HW, or a divisor of HW that is a multiple of 128 lanes.
    hw_cands = sorted({HW} | {h for h in range(128, HW, 128) if HW % h == 0},
                      reverse=True)

    for tn in n_cands:
        for ht in hw_cands:
            if blocks_bytes(tn, ht) <= usable_bytes:
                return tn, ht
    # Best effort for extreme shapes: smallest tiles.
    return n_cands[-1], hw_cands[-1]


# ------------------------------ kernel bodies ------------------------------ #

def _int_pow(x, n):
    """x**n for small positive integer n via square-and-multiply (VPU muls)."""
    result = None
    base = x
    while n > 0:
        if n & 1:
            result = base if result is None else result * base
        n >>= 1
        if n:
            base = base * base
    return result


def _whiten_and_norm(pooled, w_ref, b_ref, out_ref):
    """L2N over C -> Linear(C->Dp) -> L2N over Dp.  Padded Dp columns are 0."""
    n1 = jnp.sqrt(jnp.sum(pooled * pooled, axis=1, keepdims=True))
    pooled = pooled / (n1 + EPS)
    y = jnp.dot(pooled, w_ref[...], preferred_element_type=jnp.float32)
    y = y + b_ref[...]
    n2 = jnp.sqrt(jnp.sum(y * y, axis=1, keepdims=True))
    out_ref[...] = y / (n2 + EPS)


def _finalize(sum_xp, hw, p_val):
    """mean(x^p)^(1/p) from the spatial sum of x^p (compile-time float p)."""
    if p_val == 1.0:
        return sum_xp * (1.0 / hw)                       # plain mean, no exp/log
    # Log-domain mean^(1/p): transcendentals only touch the small pooled
    # tensor.  If every x^p underflowed to 0 the sum is 0 -> log gives -inf ->
    # exp gives 0, matching the reference's 0^(1/p) == 0.
    return jnp.exp((jnp.log(sum_xp) - math.log(hw)) * (1.0 / p_val))


def gem_head_kernel_static(x_ref, w_ref, b_ref, out_ref, acc_ref, *, p_val, hw):
    # x_ref: (TILE_N, C, HW_TILE) in the input dtype; C on sublanes, HW on
    # lanes (native NCHW layout, no wrapper transpose).  Upcast after load.
    j = pl.program_id(1)

    @pl.when(j == 0)
    def _():
        acc_ref[...] = jnp.zeros_like(acc_ref)

    xc = jnp.maximum(x_ref[...].astype(jnp.float32), EPS)   # clamp(min=eps)
    p_int = int(p_val)
    if float(p_int) == p_val and 1 <= p_int <= 16:
        xp = _int_pow(xc, p_int)                             # VPU multiplies only
    else:
        xp = jnp.exp(p_val * jnp.log(xc))                    # xc >= EPS > 0, safe
    acc_ref[...] += jnp.sum(xp, axis=2)                      # (TILE_N, C)

    @pl.when(j == pl.num_programs(1) - 1)
    def _():
        pooled = _finalize(acc_ref[...], hw, p_val)
        _whiten_and_norm(pooled, w_ref, b_ref, out_ref)


def gem_head_kernel_dynamic(p_ref, x_ref, w_ref, b_ref, out_ref, acc_ref, *, hw):
    # p_ref: (1,) f32 scalar-prefetched into SMEM (p only known at run time).
    j = pl.program_id(1)

    @pl.when(j == 0)
    def _():
        acc_ref[...] = jnp.zeros_like(acc_ref)

    p = p_ref[0]
    xc = jnp.maximum(x_ref[...].astype(jnp.float32), EPS)
    xp = jnp.exp(p * jnp.log(xc))
    acc_ref[...] += jnp.sum(xp, axis=2)

    @pl.when(j == pl.num_programs(1) - 1)
    def _():
        pooled = jnp.exp((jnp.log(acc_ref[...]) - math.log(hw)) / p)
        _whiten_and_norm(pooled, w_ref, b_ref, out_ref)


# --------------------------------- wrapper --------------------------------- #

def gem_head_net(x, p, w_dc, b_d, *, tile_n=None, hw_tile=None):
    """GeM pool -> L2N -> Linear(C->D) -> L2N.

    x:    (N, C, H, W) activations in PyTorch NCHW layout (f32 or bf16; the
          HBM copy keeps its dtype, the upcast happens in-kernel).
    p:    GeM exponent.  Python int/float -> compile-time specialization
          (integer p uses only VPU multiplies); array -> SMEM scalar prefetch.
    w_dc: (D, C) PyTorch Linear weight.   b_d: (D,) bias.
    Returns (N, D) float32.
    """
    N, C, H, W = x.shape
    HW = H * W
    x_flat = x.reshape(N, C, HW)                       # free, contiguous reshape
    x_itemsize = jnp.dtype(x_flat.dtype).itemsize

    D, Cw = w_dc.shape
    assert Cw == C, (Cw, C)
    Dp = _round_up(D, 128)                             # lane-dense output slab
    # One-time (tiny) transpose so the in-kernel matmul is a plain (M,K)x(K,N).
    w = jnp.transpose(w_dc.astype(jnp.float32))        # (C, D)
    b = jnp.reshape(b_d.astype(jnp.float32), (1, D))
    if Dp != D:
        w = jnp.pad(w, ((0, 0), (0, Dp - D)))          # zero cols -> zero outputs
        b = jnp.pad(b, ((0, 0), (0, Dp - D)))

    # ---- generation-aware VMEM budgeting ----
    cap = _vmem_capacity_bytes()                       # 128 MiB v5e/v6e, 64 MiB v7x
    usable = int(cap * 0.70)                           # headroom for Mosaic scratch
    w_blk = _round_up(C, 8) * Dp * 4
    b_blk = 8 * Dp * 4
    # Constant index-map blocks are DMA'd only once; single-buffering a large
    # weight reclaims the second buffer's VMEM for bigger x tiles (v7x win).
    single_buffer_w = w_blk >= (2 << 20)
    w_resident = (1 if single_buffer_w else 2) * (w_blk + b_blk)

    auto_tn, auto_ht = _choose_tiles(N, C, HW, x_itemsize, Dp, usable, w_resident)
    tile_n = auto_tn if tile_n is None else tile_n
    hw_tile = auto_ht if hw_tile is None else hw_tile
    if N % tile_n != 0 or (tile_n % 8 != 0 and tile_n != N):
        raise ValueError(f"bad tile_n={tile_n} for N={N}")
    if HW % hw_tile != 0 or (hw_tile % 128 != 0 and hw_tile != HW):
        raise ValueError(f"bad hw_tile={hw_tile} for HW={HW}")
    grid = (N // tile_n, HW // hw_tile)

    x_blk = (tile_n * _round_up(C, _sublane_multiple(x_itemsize))
             * _round_up(hw_tile, 128) * x_itemsize)
    o_blk = _round_up(tile_n, 8) * Dp * 4
    acc_blk = _round_up(tile_n, 8) * _round_up(C, 128) * 4
    needed = 2 * (x_blk + o_blk) + acc_blk + w_resident + (4 << 20)
    vmem_bytes = int(min(max(needed, min(32 << 20, cap // 2)), int(cap * 0.90)))

    wb_pipeline = dict(pipeline_mode=pl.Buffered(1)) if single_buffer_w else {}

    if isinstance(p, (int, float)):
        kernel = functools.partial(gem_head_kernel_static, p_val=float(p), hw=HW)
        grid_spec = pltpu.PrefetchScalarGridSpec(
            num_scalar_prefetch=0,
            grid=grid,
            in_specs=[
                pl.BlockSpec((tile_n, C, hw_tile), lambda i, j: (i, 0, j)),
                pl.BlockSpec((C, Dp), lambda i, j: (0, 0), **wb_pipeline),
                pl.BlockSpec((1, Dp), lambda i, j: (0, 0), **wb_pipeline),
            ],
            out_specs=pl.BlockSpec((tile_n, Dp), lambda i, j: (i, 0)),
            scratch_shapes=[pltpu.VMEM((tile_n, C), jnp.float32)],
        )
        call_args = (x_flat, w, b)
    else:
        kernel = functools.partial(gem_head_kernel_dynamic, hw=HW)
        grid_spec = pltpu.PrefetchScalarGridSpec(
            num_scalar_prefetch=1,                     # p -> SMEM before the grid
            grid=grid,
            in_specs=[
                pl.BlockSpec((tile_n, C, hw_tile), lambda i, j, p_ref: (i, 0, j)),
                pl.BlockSpec((C, Dp), lambda i, j, p_ref: (0, 0), **wb_pipeline),
                pl.BlockSpec((1, Dp), lambda i, j, p_ref: (0, 0), **wb_pipeline),
            ],
            out_specs=pl.BlockSpec((tile_n, Dp), lambda i, j, p_ref: (i, 0)),
            scratch_shapes=[pltpu.VMEM((tile_n, C), jnp.float32)],
        )
        call_args = (jnp.asarray(p, dtype=jnp.float32).reshape(1), x_flat, w, b)

    out_pad = pl.pallas_call(
        kernel,
        out_shape=jax.ShapeDtypeStruct((N, Dp), jnp.float32),
        grid_spec=grid_spec,
        compiler_params=pltpu.CompilerParams(
            dimension_semantics=("parallel", "arbitrary"),
            vmem_limit_bytes=vmem_bytes),
    )(*call_args)

    return out_pad[:, :D] if Dp != D else out_pad


# -------------------------------- reference -------------------------------- #

def gem_head_ref(x_nchw, p, w_dc, b_d):
    """Pure-JAX reference mirroring the PyTorch forward."""
    xc = jnp.maximum(x_nchw.astype(jnp.float32), EPS)
    pooled = jnp.mean(xc ** p, axis=(2, 3)) ** (1.0 / p)              # (N, C)
    pooled = pooled / (jnp.linalg.norm(pooled, axis=1, keepdims=True) + EPS)
    y = pooled @ w_dc.T + b_d                                         # (N, D)
    return y / (jnp.linalg.norm(y, axis=1, keepdims=True) + EPS)


if __name__ == "__main__":
    key = jax.random.PRNGKey(0)
    N, C, H, W, D = 16, 4, 16, 16, 8

    kx, kw, kb = jax.random.split(key, 3)
    x = jax.random.uniform(kx, (N, C, H, W), dtype=jnp.float32)
    w_dc = jax.random.normal(kw, (D, C), dtype=jnp.float32) * 0.1     # whiten.weight (D,C)
    b_d = jax.random.normal(kb, (D,), dtype=jnp.float32) * 0.01       # whiten.bias (D,)

    # 1) Static integer p=3 (square-and-multiply), f32 NCHW input, no transpose.
    out = jax.block_until_ready(gem_head_net(x, 3.0, w_dc, b_d))
    ref = gem_head_ref(x, 3.0, w_dc, b_d)
    assert out.shape == (N, D)
    assert jnp.allclose(out, ref, atol=1e-4, rtol=1e-4), (out, ref)

    # 2) Static non-integer compile-time p (exp(p*log) specialization).
    out_s = jax.block_until_ready(gem_head_net(x, 2.5, w_dc, b_d))
    ref_s = gem_head_ref(x, 2.5, w_dc, b_d)
    assert jnp.allclose(out_s, ref_s, atol=1e-4, rtol=1e-4), (out_s, ref_s)

    # 3) Dynamic p (SMEM scalar-prefetch fallback).
    out_d = jax.block_until_ready(gem_head_net(x, jnp.float32(2.5), w_dc, b_d))
    assert jnp.allclose(out_d, ref_s, atol=1e-4, rtol=1e-4), (out_d, ref_s)

    # 4) bf16 activations stay bf16 in HBM; upcast happens inside the kernel.
    x_bf16 = x.astype(jnp.bfloat16)
    out_b = jax.block_until_ready(gem_head_net(x_bf16, 3.0, w_dc, b_d))
    ref_b = gem_head_ref(x_bf16.astype(jnp.float32), 3.0, w_dc, b_d)
    assert jnp.allclose(out_b, ref_b, atol=3e-2, rtol=3e-2), (out_b, ref_b)

    print("KERNEL_OK")
</pallas_src>

<mosaic_0001>
module attributes {stable_mosaic.version = 11 : i64} {
  func.func @gem_head_kernel_static(%arg0: i32, %arg1: i32, %arg2: memref<8x4x256xf32, #tpu.memory_space<vmem>>, %arg3: memref<4x128xf32, #tpu.memory_space<vmem>>, %arg4: memref<1x128xf32, #tpu.memory_space<vmem>>, %arg5: memref<8x128xf32, #tpu.memory_space<vmem>>, %arg6: memref<8x4xf32, #tpu.memory_space<vmem>>) attributes {dimension_semantics = [#tpu.dimension_semantics<parallel>, #tpu.dimension_semantics<arbitrary>], iteration_bounds = array<i64: 2, 1>, scalar_prefetch = 0 : i64, scratch_operands = 1 : i64, tpu.core_type = #tpu.core_type<tc>, window_params = [{transform_indices = @transform_0, window_bounds = array<i64: 8, 4, 256>}, {pipeline_mode = #tpu.pipeline_mode<synchronous>, transform_indices = @transform_1, window_bounds = array<i64: 4, 128>}, {pipeline_mode = #tpu.pipeline_mode<synchronous>, transform_indices = @transform_2, window_bounds = array<i64: 1, 128>}, {transform_indices = @transform_3, window_bounds = array<i64: 8, 128>}]} {
    %c0_i32 = arith.constant 0 : i32
    %0 = arith.cmpi eq, %arg1, %c0_i32 : i32
    %1 = arith.extui %0 : i1 to i32
    %c0_i32_0 = arith.constant 0 : i32
    %2 = arith.cmpi ne, %1, %c0_i32_0 : i32
    scf.if %2 {
      %cst_10 = arith.constant 0.000000e+00 : f32
      %15 = vector.broadcast %cst_10 : f32 to vector<8x4xf32>
      %c0_11 = arith.constant 0 : index
      %c0_12 = arith.constant 0 : index
      %16 = vector.load %arg6[%c0_11, %c0_12] : memref<8x4xf32, #tpu.memory_space<vmem>>, vector<8x4xf32>
      tpu.vector_store %arg6[%c0_11, %c0_12], %15 {strides = array<i32>} : memref<8x4xf32, #tpu.memory_space<vmem>>, vector<8x4xf32>,
    } else {
    }
    %c0 = arith.constant 0 : index
    %c0_1 = arith.constant 0 : index
    %c0_2 = arith.constant 0 : index
    %3 = vector.load %arg2[%c0, %c0_1, %c0_2] : memref<8x4x256xf32, #tpu.memory_space<vmem>>, vector<8x4x256xf32>
    %cst = arith.constant 9.99999997E-7 : f32
    %4 = vector.broadcast %cst : f32 to vector<8x4x256xf32>
    %5 = arith.maximumf %3, %4 : vector<8x4x256xf32>
    %6 = arith.mulf %5, %5 : vector<8x4x256xf32>
    %7 = arith.mulf %5, %6 : vector<8x4x256xf32>
    %c0_3 = arith.constant 0 : index
    %c0_4 = arith.constant 0 : index
    %8 = vector.load %arg6[%c0_3, %c0_4] : memref<8x4xf32, #tpu.memory_space<vmem>>, vector<8x4xf32>
    %cst_5 = arith.constant dense<0.000000e+00> : vector<8x4xf32>
    %9 = vector.multi_reduction <add>, %7, %cst_5 [2] : vector<8x4x256xf32> to vector<8x4xf32>
    %10 = arith.addf %8, %9 : vector<8x4xf32>
    %c0_6 = arith.constant 0 : index
    %c0_7 = arith.constant 0 : index
    %11 = vector.load %arg6[%c0_6, %c0_7] : memref<8x4xf32, #tpu.memory_space<vmem>>, vector<8x4xf32>
    tpu.vector_store %arg6[%c0_6, %c0_7], %10 {strides = array<i32>} : memref<8x4xf32, #tpu.memory_space<vmem>>, vector<8x4xf32>,
    %c0_i32_8 = arith.constant 0 : i32
    %12 = arith.cmpi eq, %arg1, %c0_i32_8 : i32
    %13 = arith.extui %12 : i1 to i32
    %c0_i32_9 = arith.constant 0 : i32
    %14 = arith.cmpi ne, %13, %c0_i32_9 : i32
    scf.if %14 {
      %c0_10 = arith.constant 0 : index
      %c0_11 = arith.constant 0 : index
      %15 = vector.load %arg6[%c0_10, %c0_11] : memref<8x4xf32, #tpu.memory_space<vmem>>, vector<8x4xf32>
      %16 = math.log %15 : vector<8x4xf32>
      %cst_12 = arith.constant 5.54517746 : f32
      %17 = vector.broadcast %cst_12 : f32 to vector<8x4xf32>
      %18 = arith.subf %16, %17 : vector<8x4xf32>
      %cst_13 = arith.constant 0.333333343 : f32
      %19 = vector.broadcast %cst_13 : f32 to vector<8x4xf32>
      %20 = arith.mulf %18, %19 : vector<8x4xf32>
      %21 = math.exp %20 : vector<8x4xf32>
      %22 = arith.mulf %21, %21 : vector<8x4xf32>
      %cst_14 = arith.constant dense<0.000000e+00> : vector<8xf32>
      %23 = vector.multi_reduction <add>, %22, %cst_14 [1] : vector<8x4xf32> to vector<8xf32>
      %24 = vector.shape_cast %23 : vector<8xf32> to vector<8x1xf32>
      %25 = math.sqrt %24 : vector<8x1xf32>
      %cst_15 = arith.constant 9.99999997E-7 : f32
      %26 = vector.broadcast %cst_15 : f32 to vector<8x1xf32>
      %27 = arith.addf %25, %26 : vector<8x1xf32>
      %28 = vector.broadcast %27 : vector<8x1xf32> to vector<8x4xf32>
      %29 = arith.divf %21, %28 : vector<8x4xf32>
      %c0_16 = arith.constant 0 : index
      %c0_17 = arith.constant 0 : index
      %30 = vector.load %arg3[%c0_16, %c0_17] : memref<4x128xf32, #tpu.memory_space<vmem>>, vector<4x128xf32>
      %cst_18 = arith.constant dense<0.000000e+00> : vector<8x128xf32>
      %31 = tpu.matmul %29, %30, %cst_18 {dimension_numbers = #tpu.dot_dimension_numbers<[1], [0], [0], [1], [0, 0, 1, 1], [], []>} : vector<8x4xf32>, vector<4x128xf32>, vector<8x128xf32> -> vector<8x128xf32>
      %c0_19 = arith.constant 0 : index
      %c0_20 = arith.constant 0 : index
      %32 = vector.load %arg4[%c0_19, %c0_20] : memref<1x128xf32, #tpu.memory_space<vmem>>, vector<1x128xf32>
      %33 = vector.broadcast %32 : vector<1x128xf32> to vector<8x128xf32>
      %34 = arith.addf %31, %33 : vector<8x128xf32>
      %35 = arith.mulf %34, %34 : vector<8x128xf32>
      %cst_21 = arith.constant dense<0.000000e+00> : vector<8xf32>
      %36 = vector.multi_reduction <add>, %35, %cst_21 [1] : vector<8x128xf32> to vector<8xf32>
      %37 = vector.shape_cast %36 : vector<8xf32> to vector<8x1xf32>
      %38 = math.sqrt %37 : vector<8x1xf32>
      %cst_22 = arith.constant 9.99999997E-7 : f32
      %39 = vector.broadcast %cst_22 : f32 to vector<8x1xf32>
      %40 = arith.addf %38, %39 : vector<8x1xf32>
      %41 = vector.broadcast %40 : vector<8x1xf32> to vector<8x128xf32>
      %42 = arith.divf %34, %41 : vector<8x128xf32>
      %c0_23 = arith.constant 0 : index
      %c0_24 = arith.constant 0 : index
      %43 = vector.load %arg5[%c0_23, %c0_24] : memref<8x128xf32, #tpu.memory_space<vmem>>, vector<8x128xf32>
      tpu.vector_store %arg5[%c0_23, %c0_24], %42 {strides = array<i32>} : memref<8x128xf32, #tpu.memory_space<vmem>>, vector<8x128xf32>,
    } else {
    }
    return
  }
  func.func @transform_0(%arg0: i32, %arg1: i32) -> (i32, i32, i32) {
    %c0_i32 = arith.constant 0 : i32
    %c0_i32_0 = arith.constant 0 : i32
    return %arg0, %c0_i32, %arg1 : i32, i32, i32
  }
  func.func @transform_1(%arg0: i32, %arg1: i32) -> (i32, i32) {
    %c0_i32 = arith.constant 0 : i32
    %c0_i32_0 = arith.constant 0 : i32
    %c0_i32_1 = arith.constant 0 : i32
    return %c0_i32, %c0_i32_0 : i32, i32
  }
  func.func @transform_2(%arg0: i32, %arg1: i32) -> (i32, i32) {
    %c0_i32 = arith.constant 0 : i32
    %c0_i32_0 = arith.constant 0 : i32
    %c0_i32_1 = arith.constant 0 : i32
    return %c0_i32, %c0_i32_0 : i32, i32
  }
  func.func @transform_3(%arg0: i32, %arg1: i32) -> (i32, i32) {
    %c0_i32 = arith.constant 0 : i32
    %c0_i32_0 = arith.constant 0 : i32
    return %arg0, %c0_i32 : i32, i32
  }
}

</mosaic_0001>

<llo_original>
// kernel: tpu_custom_call.1
$region0: #{tpu_custom_call.1}
  #allocation0 [shape = 'u32[]', space=smem, size = 0x4, offset = 0x4, fixed_abs, tag = 'smem constant byte address 0x4 - core index']
  #allocation1 [shape = 'u32[72,128]{1,0:T(1,128)}', space=vmem, size = 0x9000, scoped, tag = 'internal scratch']
  #allocation2 [shape = 'f32[8,4]{1,0:T(8,128)}', space=vmem, size = 0x1000, scoped, tag = 'scratch operand']
  %s0 = inlined_call_operand.hbm [shape: f32[16,4,256], index: 0, kind: input, shape index: {}]
  %s1 = inlined_call_operand.hbm [shape: f32[4,128], index: 1, kind: input, shape index: {}]
  %s2 = inlined_call_operand.vmem [shape: f32[1,128], index: 2, kind: input, shape index: {}]
  %s3 = inlined_call_operand.hbm [shape: f32[16,128], index: 3, kind: output, shape index: {}]
  %s4 = sld [smem:[#allocation0]]
  $region61: #{tpu_custom_call.1} parent=0
    _
  %s6 = ssub.s32 1, %s4
  %s7 = scalar_select 0, %s6, %s4
  $region1: #{tpu_custom_call.1} parent=0
    #allocation3 [shape = 'u8[65536]{0}', space=vmem, size = 0x10000, scoped, tag = 'input window, operand 0']
    #allocation4 [shape = 's32[2]{0}', space=sflag, size = 0x8, scoped, tag = 'scoped memory for tpu_custom_call.1']
    #allocation5 [shape = 's32[2]{0}', space=sflag, size = 0x8, scoped, tag = 'scoped memory for tpu_custom_call.1']
    #allocation6 [shape = 'u8[2048]{0}', space=vmem, size = 0x800, scoped, tag = 'input window, operand 1, single buffered']
    #allocation7 [shape = 's32[1]{0}', space=sflag, size = 0x4, scoped, tag = 'scoped memory for tpu_custom_call.1']
    #allocation8 [shape = 'u8[8192]{0}', space=vmem, size = 0x2000, scoped, tag = 'output window, operand 0']
    %8 = vsyncpa [#allocation4], 0
    %s9 = scalar_lea.sflag [#allocation4], 1
    %10 = vsyncpa %s9, 0
    %11 = vsyncpa [#allocation7], 0
    %12 = vsyncpa [#allocation5], 0
    %s13 = scalar_lea.sflag [#allocation5], 1
    %14 = vsyncpa %s13, 0
    loop: start=0, step=1, limit=4
    $region2: #{tpu_custom_call.1} parent=1 // loop_pre_header
      _
    $region3: #{tpu_custom_call.1} parent=1 // loop_header
      %s16 = sphi 0, %s20
      %p17 = scmp.ge.s32.totalorder %s16, 4
      %s23 = sphi 0, %s35
      %s24 = sphi 0, %s31
      %s25 = sphi 0, %s23
      %s26 = sphi 0, %s24
      %s27 = sphi 0, %s25
      %s28 = sphi 0, %s26
      %s40 = sphi 0, %s42
      %s43 = sphi 0, %s40
      %s44 = sphi 0, %s43
      %s60 = sphi 0, %s44
      %s64 = sphi 0, %s64
      %s66 = sphi 0, %s64
      %s67 = sphi 0, %s66
      %s81 = sphi 0, %s67
      %s85 = sphi 0, %s85
      %s87 = sphi 0, %s85
      %s88 = sphi 0, %s87
      %s102 = sphi 0, %s88
      %s108 = sphi 0, %s110
      %s111 = sphi 0, %s108
      %s112 = sphi 0, %s111
      %s128 = sphi 0, %s112
    $region4: #{tpu_custom_call.1} parent=1 // loop_header_branch
      %19 = sbr.rel (%p17) target = $region8
    $region5: #{tpu_custom_call.1} parent=1 // loop_body
      %s21 = ssub.s32 %s16, 1
      %s22 = ssub.s32 %s16, 2
      %s29 = sadd.s32 1, %s24
      %p30 = scmp.ge.s32.totalorder %s29, 1
      %s31 = scalar_select %p30, 0, %s29
      %s32 = sadd.s32 1, %s23
      %s33 = scalar_select %p30, %s32, %s23
      %p34 = scmp.ge.s32.totalorder %s33, 2
      %s35 = scalar_select %p34, 0, %s33
      %s36 = ssub.s32 %s23, %s35
      %s37 = ssub.s32 %s24, %s31
      %s38 = sor.u32 %s36, %s37
      %p39 = scmp.eq.s32.totalorder %s38, 0
      %s41 = sadd.s32 %s40, 1
      %s42 = scalar_select %p39, %s40, %s41
      %p45 = pneg %p39
      %p46 = scmp.eq.s32.totalorder %s16, 1
      %p47 = por %p45, %p46
      %p48 = scmp.ne.s32.totalorder %s40, %s43
      %p49 = scmp.eq.s32.totalorder %s16, 0
      %p50 = por %p48, %p49
      %p51 = scmp.ne.s32.totalorder %s40, %s43
      %p52 = scmp.eq.s32.totalorder %s21, 1
      %p53 = por %p51, %p52
      %p54 = scmp.ne.s32.totalorder %s43, %s44
      %p55 = scmp.eq.s32.totalorder %s21, 0
      %p56 = por %p54, %p55
      %p57 = scmp.ne.s32.totalorder %s43, %s44
      %p58 = scmp.eq.s32.totalorder %s22, 1
      %p59 = por %p57, %p58
      %p61 = scmp.ne.s32.totalorder %s44, %s60
      %p62 = scmp.eq.s32.totalorder %s22, 0
      %p63 = por %p61, %p62
      %s65 = sadd.s32 %s64, 1
      %p68 = scmp.eq.s32.totalorder %s16, 1
      %p69 = scmp.ne.s32.totalorder %s64, %s66
      %p70 = scmp.eq.s32.totalorder %s16, 0
      %p71 = por %p69, %p70
      %p72 = scmp.ne.s32.totalorder %s64, %s66
      %p73 = scmp.eq.s32.totalorder %s21, 1
      %p74 = por %p72, %p73
      %p75 = scmp.ne.s32.totalorder %s66, %s67
      %p76 = scmp.eq.s32.totalorder %s21, 0
      %p77 = por %p75, %p76
      %p78 = scmp.ne.s32.totalorder %s66, %s67
      %p79 = scmp.eq.s32.totalorder %s22, 1
      %p80 = por %p78, %p79
      %p82 = scmp.ne.s32.totalorder %s67, %s81
      %p83 = scmp.eq.s32.totalorder %s22, 0
      %p84 = por %p82, %p83
      %s86 = sadd.s32 %s85, 1
      %p89 = scmp.eq.s32.totalorder %s16, 1
      %p90 = scmp.ne.s32.totalorder %s85, %s87
      %p91 = scmp.eq.s32.totalorder %s16, 0
      %p92 = por %p90, %p91
      %p93 = scmp.ne.s32.totalorder %s85, %s87
      %p94 = scmp.eq.s32.totalorder %s21, 1
      %p95 = por %p93, %p94
      %p96 = scmp.ne.s32.totalorder %s87, %s88
      %p97 = scmp.eq.s32.totalorder %s21, 0
      %p98 = por %p96, %p97
      %p99 = scmp.ne.s32.totalorder %s87, %s88
      %p100 = scmp.eq.s32.totalorder %s22, 1
      %p101 = por %p99, %p100
      %p103 = scmp.ne.s32.totalorder %s88, %s102
      %p104 = scmp.eq.s32.totalorder %s22, 0
      %p105 = por %p103, %p104
      %s106 = ssub.s32 %s23, %s35
      %p107 = scmp.eq.s32.totalorder %s106, 0
      %s109 = sadd.s32 %s108, 1
      %s110 = scalar_select %p107, %s108, %s109
      %p113 = pneg %p107
      %p114 = scmp.eq.s32.totalorder %s16, 1
      %p115 = por %p113, %p114
      %p116 = scmp.ne.s32.totalorder %s108, %s111
      %p117 = scmp.eq.s32.totalorder %s16, 0
      %p118 = por %p116, %p117
      %p119 = scmp.ne.s32.totalorder %s108, %s111
      %p120 = scmp.eq.s32.totalorder %s21, 1
      %p121 = por %p119, %p120
      %p122 = scmp.ne.s32.totalorder %s111, %s112
      %p123 = scmp.eq.s32.totalorder %s21, 0
      %p124 = por %p122, %p123
      %p125 = scmp.ne.s32.totalorder %s111, %s112
      %p126 = scmp.eq.s32.totalorder %s22, 1
      %p127 = por %p125, %p126
      %p129 = scmp.ne.s32.totalorder %s112, %s128
      %p130 = scmp.eq.s32.totalorder %s22, 0
      %p131 = por %p129, %p130
      %p132 = scmp.le.s32.totalorder 1, %s16
      %p133 = scmp.lt.s32.totalorder %s16, 3
      %p134 = pnand %p132, %p133
      %p135 = pneg %p134
      // Predicated region
      $region9: #{tpu_custom_call.1} parent=5 // pred_check
        _
      $region10: #{tpu_custom_call.1} parent=5 // pred_check_branch
        %137 = sbr.rel (%p134) target = $region12
      $region11: #{tpu_custom_call.1} parent=5 // pred_region
        %s138 = ssub.s32 %s16, 1
        // Predicated region
        $region13: #{tpu_custom_call.1} parent=11 // pred_check
          %p139 = pneg %p77
        $region14: #{tpu_custom_call.1} parent=11 // pred_check_branch
          %141 = sbr.rel (%p139) target = $region16
        $region15: #{tpu_custom_call.1} parent=11 // pred_region
          %143 = vsyncadd [#allocation7], 0
          %s145 = sshll.u32 %s1, 4
          %s146 = int_to_ptr.hbm [resolvable:$true] %s145
          %s147 = sshll.u32 [#allocation6], 4
          %s148 = int_to_ptr.vmem [resolvable:$true] %s147
          %150 = dma.hbm_to_vmem [thread:$0]  %s146, 64, %s148, [#allocation7]
        $region16: #{tpu_custom_call.1} parent=11 // pred_fallthru
          _
        // Predicated region
        $region17: #{tpu_custom_call.1} parent=11 // pred_check
          %p151 = pneg %p98
        $region18: #{tpu_custom_call.1} parent=11 // pred_check_branch
          %153 = sbr.rel (%p151) target = $region20
        $region19: #{tpu_custom_call.1} parent=11 // pred_region
          _
        $region20: #{tpu_custom_call.1} parent=11 // pred_fallthru
          _
      $region12: #{tpu_custom_call.1} parent=5 // pred_fallthru
        _
      %p154 = scmp.lt.s32.totalorder %s16, 2
      // Predicated region
      $region21: #{tpu_custom_call.1} parent=5 // pred_check
        %p155 = pneg %p154
      $region22: #{tpu_custom_call.1} parent=5 // pred_check_branch
        %157 = sbr.rel (%p155) target = $region24
      $region23: #{tpu_custom_call.1} parent=5 // pred_region
        // Predicated region
        $region25: #{tpu_custom_call.1} parent=23 // pred_check
          %p158 = pneg %p50
        $region26: #{tpu_custom_call.1} parent=23 // pred_check_branch
          %160 = sbr.rel (%p158) target = $region28
        $region27: #{tpu_custom_call.1} parent=23 // pred_region
          %s161 = sand.u32 %s40, 1
          %s162 = scalar_lea.sflag [#allocation4], %s161
          %s163 = sand.u32 %s40, 1
          %s164 = smul.addr %s163, 64
          %s165 = scalar_lea.vmem [#allocation3], %s164
          %s166 = smul.u32 8, %s23
          %s167 = smul.u32 2, %s24
          %169 = vsyncadd %s162, 0
          %s170 = smul.addr %s166, 2
          %s171 = sadd.s32 %s167, %s170
          %s172 = smul.addr %s171, 4
          %s173 = scalar_lea.hbm %s0, %s172
          %s174 = sshll.u32 %s173, 4
          %s175 = int_to_ptr.hbm [resolvable:$true] %s174
          %s176 = sshll.u32 %s165, 4
          %s177 = int_to_ptr.vmem [resolvable:$true] %s176
          %182 = dma.hbm_to_vmem [thread:$0]  %s175, 1024, %s177, %s162, 128, 128, 8
        $region28: #{tpu_custom_call.1} parent=23 // pred_fallthru
          _
      $region24: #{tpu_custom_call.1} parent=5 // pred_fallthru
        _
      %p183 = scmp.le.s32.totalorder 1, %s16
      %p184 = scmp.lt.s32.totalorder %s16, 3
      %p185 = pnand %p183, %p184
      %p186 = pneg %p185
      // Predicated region
      $region29: #{tpu_custom_call.1} parent=5 // pred_check
        _
      $region30: #{tpu_custom_call.1} parent=5 // pred_check_branch
        %188 = sbr.rel (%p185) target = $region32
      $region31: #{tpu_custom_call.1} parent=5 // pred_region
        %s189 = ssub.s32 %s16, 1
        %s190 = sand.u32 %s43, 1
        %s191 = scalar_lea.sflag [#allocation4], %s190
        %s192 = sand.u32 %s43, 1
        %s193 = smul.addr %s192, 64
        %s194 = scalar_lea.vmem [#allocation3], %s193
        // Predicated region
        $region33: #{tpu_custom_call.1} parent=31 // pred_check
          %p195 = pneg %p56
        $region34: #{tpu_custom_call.1} parent=31 // pred_check_branch
          %197 = sbr.rel (%p195) target = $region36
        $region35: #{tpu_custom_call.1} parent=31 // pred_region
          %199 = dma.done %s191, 1024
        $region36: #{tpu_custom_call.1} parent=31 // pred_fallthru
          _
        // Predicated region
        $region37: #{tpu_custom_call.1} parent=31 // pred_check
          %p200 = pneg %p77
        $region38: #{tpu_custom_call.1} parent=31 // pred_check_branch
          %202 = sbr.rel (%p200) target = $region40
        $region39: #{tpu_custom_call.1} parent=31 // pred_region
          %204 = dma.done [#allocation7], 64
        $region40: #{tpu_custom_call.1} parent=31 // pred_fallthru
          _
        %s205 = sand.u32 %s43, 1
        %s206 = scalar_lea.sflag [#allocation4], %s205
        %s207 = sand.u32 %s43, 1
        %s208 = smul.addr %s207, 64
        %s209 = scalar_lea.vmem [#allocation3], %s208
        %p210 = pneg %p56
        %p211 = pneg %p53
        %p212 = pneg %p77
        %p213 = pneg %p74
        %p214 = pneg %p98
        %p215 = pneg %p95
        %p216 = pneg %p124
        %p217 = pneg %p121
        %s218 = sand.u32 %s111, 1
        %s219 = scalar_lea.sflag [#allocation5], %s218
        %s220 = sand.u32 %s111, 1
        %s221 = smul.addr %s220, 8
        %s222 = scalar_lea.vmem [#allocation8], %s221
        %s223 = smul.u32 8, %s25
        %s224 = smul.u32 2, %s26
        %p225 = scmp.eq.s32.totalorder %s26, 0
        // Predicated region
        $region41: #{tpu_custom_call.1} parent=31 // pred_check
          %p226 = pneg %p225
        $region42: #{tpu_custom_call.1} parent=31 // pred_check_branch
          %228 = sbr.rel (%p226) target = $region44
        $region43: #{tpu_custom_call.1} parent=31 // pred_region
          %vm229 = vcmask 31744
          %230 = vst.msk [vmem:[#allocation2] sm:$0xff] %vm229, 0.0
        $region44: #{tpu_custom_call.1} parent=31 // pred_fallthru
          _
        %v231 = vld [vmem:[%s194] sm:$0xff]
        %v232 = vld [vmem:[%s194 + $0x8] sm:$0xff]
        %v233 = vld [vmem:[%s194 + $0x10] sm:$0xff]
        %v234 = vld [vmem:[%s194 + $0x18] sm:$0xff]
        %v235 = vld [vmem:[%s194 + $0x20] sm:$0xff]
        %v236 = vld [vmem:[%s194 + $0x28] sm:$0xff]
        %v237 = vld [vmem:[%s194 + $0x30] sm:$0xff]
        %v238 = vld [vmem:[%s194 + $0x38] sm:$0xff]
        %v239 = vmax.f32 %v231, 1e-06
        %v240 = vmax.f32 %v232, 1e-06
        %v241 = vmax.f32 %v233, 1e-06
        %v242 = vmax.f32 %v234, 1e-06
        %v243 = vmax.f32 %v235, 1e-06
        %v244 = vmax.f32 %v236, 1e-06
        %v245 = vmax.f32 %v237, 1e-06
        %v246 = vmax.f32 %v238, 1e-06
        %v247 = vmul.f32 %v239, %v239
        %v248 = vmul.f32 %v240, %v240
        %v249 = vmul.f32 %v241, %v241
        %v250 = vmul.f32 %v242, %v242
        %v251 = vmul.f32 %v243, %v243
        %v252 = vmul.f32 %v244, %v244
        %v253 = vmul.f32 %v245, %v245
        %v254 = vmul.f32 %v246, %v246
        %v255 = vmul.f32 %v239, %v247
        %v256 = vmul.f32 %v240, %v248
        %v257 = vmul.f32 %v241, %v249
        %v258 = vmul.f32 %v242, %v250
        %v259 = vmul.f32 %v243, %v251
        %v260 = vmul.f32 %v244, %v252
        %v261 = vmul.f32 %v245, %v253
        %v262 = vmul.f32 %v246, %v254
        %v263 = vld [vmem:[#allocation2] sm:$0xff]
        %272 = vst [vmem:[#allocation1] ss:$2 sm:$0xff] %v255
        %v273 = vld.sshfl [vmem:[#allocation1] sm:$0xff pattern:$0x75316420]
        %v274 = vld.sshfl [vmem:[#allocation1 + $0x8] sm:$0xff pattern:$0x75316420]
        %s275 = scalar_lea.vmem [#allocation1], 16
        %276 = vst [vmem:[%s275] ss:$2 sm:$0xff] %v256
        %v277 = vld.sshfl [vmem:[#allocation1 + $0x10] sm:$0xff pattern:$0x75316420]
        %v278 = vld.sshfl [vmem:[#allocation1 + $0x18] sm:$0xff pattern:$0x75316420]
        %s279 = scalar_lea.vmem [#allocation1], 32
        %280 = vst [vmem:[%s279] ss:$2 sm:$0xff] %v257
        %v281 = vld.sshfl [vmem:[#allocation1 + $0x20] sm:$0xff pattern:$0x75316420]
        %v282 = vld.sshfl [vmem:[#allocation1 + $0x28] sm:$0xff pattern:$0x75316420]
        %s283 = scalar_lea.vmem [#allocation1], 48
        %284 = vst [vmem:[%s283] ss:$2 sm:$0xff] %v258
        %v285 = vld.sshfl [vmem:[#allocation1 + $0x30] sm:$0xff pattern:$0x75316420]
        %v286 = vld.sshfl [vmem:[#allocation1 + $0x38] sm:$0xff pattern:$0x75316420]
        %287 = vst [vmem:[#allocation1] ss:$2 sm:$0xff] %v259
        %v288 = vld.sshfl [vmem:[#allocation1] sm:$0xff pattern:$0x75316420]
        %v289 = vld.sshfl [vmem:[#allocation1 + $0x8] sm:$0xff pattern:$0x75316420]
        %290 = vst [vmem:[%s275] ss:$2 sm:$0xff] %v260
        %v291 = vld.sshfl [vmem:[#allocation1 + $0x10] sm:$0xff pattern:$0x75316420]
        %v292 = vld.sshfl [vmem:[#allocation1 + $0x18] sm:$0xff pattern:$0x75316420]
        %293 = vst [vmem:[%s279] ss:$2 sm:$0xff] %v261
        %v294 = vld.sshfl [vmem:[#allocation1 + $0x20] sm:$0xff pattern:$0x75316420]
        %v295 = vld.sshfl [vmem:[#allocation1 + $0x28] sm:$0xff pattern:$0x75316420]
        %296 = vst [vmem:[%s283] ss:$2 sm:$0xff] %v262
        %v297 = vld.sshfl [vmem:[#allocation1 + $0x30] sm:$0xff pattern:$0x75316420]
        %v298 = vld.sshfl [vmem:[#allocation1 + $0x38] sm:$0xff pattern:$0x75316420]
        %vm315 = vcmask 1043456
        %v316 = vsel %vm315, %v273, 0.0
        %v317 = vsel %vm315, %v274, 0.0
        %v318 = vadd.f32 %v316, %v317
        %319 = vadd.xlane.f32.xlu0 %v318
        %v320 = vpop.xlane.xlu0 %319
        %v321 = vsel %vm315, %v277, 0.0
        %v322 = vsel %vm315, %v278, 0.0
        %v323 = vadd.f32 %v321, %v322
        %324 = vadd.xlane.f32.xlu0 %v323
        %v325 = vpop.xlane.xlu0 %324
        %v326 = vsel %vm315, %v281, 0.0
        %v327 = vsel %vm315, %v282, 0.0
        %v328 = vadd.f32 %v326, %v327
        %329 = vadd.xlane.f32.xlu0 %v328
        %v330 = vpop.xlane.xlu0 %329
        %v331 = vsel %vm315, %v285, 0.0
        %v332 = vsel %vm315, %v286, 0.0
        %v333 = vadd.f32 %v331, %v332
        %334 = vadd.xlane.f32.xlu0 %v333
        %v335 = vpop.xlane.xlu0 %334
        %v336 = vsel %vm315, %v288, 0.0
        %v337 = vsel %vm315, %v289, 0.0
        %v338 = vadd.f32 %v336, %v337
        %339 = vadd.xlane.f32.xlu0 %v338
        %v340 = vpop.xlane.xlu0 %339
        %v341 = vsel %vm315, %v291, 0.0
        %v342 = vsel %vm315, %v292, 0.0
        %v343 = vadd.f32 %v341, %v342
        %344 = vadd.xlane.f32.xlu0 %v343
        %v345 = vpop.xlane.xlu0 %344
        %v346 = vsel %vm315, %v294, 0.0
        %v347 = vsel %vm315, %v295, 0.0
        %v348 = vadd.f32 %v346, %v347
        %349 = vadd.xlane.f32.xlu0 %v348
        %v350 = vpop.xlane.xlu0 %349
        %v351 = vsel %vm315, %v297, 0.0
        %v352 = vsel %vm315, %v298, 0.0
        %v353 = vadd.f32 %v351, %v352
        %354 = vadd.xlane.f32.xlu0 %v353
        %v355 = vpop.xlane.xlu0 %354
        %v364 = vlaneseq
        %v365 = vand.u32 %v364, 127
        %v366 = vperm.slane %v320, %v365
        %v367 = vperm.slane %v325, %v365
        %v368 = vperm.slane %v330, %v365
        %v369 = vperm.slane %v335, %v365
        %v370 = vperm.slane %v340, %v365
        %v371 = vperm.slane %v345, %v365
        %v372 = vperm.slane %v350, %v365
        %v373 = vperm.slane %v355, %v365
        %vm374 = vcmask 1041409
        %v375 = vsel %vm374, %v367, %v366
        %vm376 = vcmask 1042434
        %v377 = vsel %vm376, %v368, %v375
        %vm378 = vcmask 1043459
        %v379 = vsel %vm378, %v369, %v377
        %vm380 = vcmask 1044484
        %v381 = vsel %vm380, %v370, %v379
        %vm382 = vcmask 1045509
        %v383 = vsel %vm382, %v371, %v381
        %vm384 = vcmask 1046534
        %v385 = vsel %vm384, %v372, %v383
        %vm386 = vcmask 1047559
        %v387 = vsel %vm386, %v373, %v385
        %v389 = vadd.f32 %v263, %v387
        %vm390 = vcmask 31744
        %391 = vst.msk [vmem:[#allocation2] sm:$0xff] %vm390, %v389
        // Predicated region
        $region45: #{tpu_custom_call.1} parent=31 // pred_check
          %p392 = pneg %p225
        $region46: #{tpu_custom_call.1} parent=31 // pred_check_branch
          %394 = sbr.rel (%p392) target = $region48
        $region47: #{tpu_custom_call.1} parent=31 // pred_region
          %v395 = vld [vmem:[#allocation2] sm:$0xff]
          %v396 = vlog2.pop %v395
          %v397 = vmul.f32 %v396, 0.6931472
          %v398 = vsub.f32 %v397, 5.5451775
          %v399 = vmul.f32 %v398, 0.33333334
          %v400 = vmul.f32 %v399, 1.442695
          %v401 = vpow.pop %v400
          %v402 = vmul.f32 %v401, %v401
          %v403 = vsel %vm390, %v402, 0.0
          %404 = vadd.xlane.f32.xlu0 %v403
          %v405 = vpop.xlane.xlu0 %404
          %v406 = vrsqrt.pop %v405
          %v407 = vmul.f32 %v406, %v405
          %v408 = vmul.f32 %v407, %v406
          %v409 = vmul.f32 0.5, %v408
          %v410 = vsub.f32 1.5, %v409
          %v411 = vmul.f32 %v406, %v410
          %v412 = vmul.f32 %v405, %v411
          %vm413 = vcmp.eq.f32.partialorder %v405, inf
          %v414 = vsel %vm413, %v405, %v412
          %vm415 = vcmp.eq.f32.partialorder %v405, 0.0
          %v416 = vand.u32 %v405, 2147483648
          %v417 = vsel %vm415, %v416, %v414
          %v418 = vadd.f32 %v417, 1e-06
          %v419 = vrcp.pop %v418
          %v420 = vmul.f32 %v418, %v419
          %v421 = vsub.f32 1.0, %v420
          %v422 = vmul.f32 %v419, %v421
          %v423 = vadd.f32 %v419, %v422
          %vm424 = vweird.f32 %v418
          %vm425 = vweird.f32 %v419
          %vm426 = vmor %vm424, %vm425
          %v427 = vsel %vm426, %v419, %v423
          %v428 = vand.u32 2147483647, %v418
          %vm429 = vcmp.eq.f32.partialorder %v428, 8.507059e+37
          %v430 = vand.u32 %v418, 2147483648
          %v431 = vor.u32 1.1754944e-38, %v430
          %v432 = vsel %vm429, %v431, %v427
          %v433 = vmul.f32 %v401, %v432
          %v434 = vld [vmem:[#allocation6] sm:$0xf]
          %v435 = vld [vmem:[%s2] sm:$0x1]
          %v437 = vperm.slane %v435, 0
          %v440 = vsel %vm390, %v433, 0
          %v443 = vsel %vm315, %v434, 0
          %445 = vmatpush.msra.mxu0 0.0
          %446 = vmatpush.msra.mxu0 0.0
          %447 = vmatpush.msra.mxu0 0.0
          %448 = vmatpush.msra.mxu0 0.0
          %449 = vmatpush.msra.mxu0 0.0
          %450 = vmatpush.msra.mxu0 0.0
          %451 = vmatpush.msra.mxu0 0.0
          %452 = vmatpush.msra.mxu0 0.0
          %453 = vmatpush.msra.mxu0 0.0
          %454 = vmatpush.msra.mxu0 0.0
          %455 = vmatpush.msra.mxu0 0.0
          %456 = vmatpush.msra.mxu0 0.0
          %457 = vmatpush.msra.mxu0 0.0
          %458 = vmatpush.msra.mxu0 0.0
          %459 = vmatpush.msra.mxu0 0.0
          %460 = vmatpush.msra.mxu0 %v443
          %461 = vmatmul.f32.gmra.mxu0 %v440
          %v462 = vpop.f32.mrf.mxu0
          %v463 = vadd.f32 %v437, %v462
          %464 = vdwg.mxu0
          %v465 = vmul.f32 %v463, %v463
          %466 = vadd.xlane.f32.xlu0 %v465
          %v467 = vpop.xlane.xlu0 %466
          %v468 = vrsqrt.pop %v467
          %v469 = vmul.f32 %v468, %v467
          %v470 = vmul.f32 %v469, %v468
          %v471 = vmul.f32 0.5, %v470
          %v472 = vsub.f32 1.5, %v471
          %v473 = vmul.f32 %v468, %v472
          %v474 = vmul.f32 %v467, %v473
          %vm475 = vcmp.eq.f32.partialorder %v467, inf
          %v476 = vsel %vm475, %v467, %v474
          %vm477 = vcmp.eq.f32.partialorder %v467, 0.0
          %v478 = vand.u32 %v467, 2147483648
          %v479 = vsel %vm477, %v478, %v476
          %v480 = vadd.f32 %v479, 1e-06
          %v481 = vrcp.pop %v480
          %v482 = vmul.f32 %v480, %v481
          %v483 = vsub.f32 1.0, %v482
          %v484 = vmul.f32 %v481, %v483
          %v485 = vadd.f32 %v481, %v484
          %vm486 = vweird.f32 %v480
          %vm487 = vweird.f32 %v481
          %vm488 = vmor %vm486, %vm487
          %v489 = vsel %vm488, %v481, %v485
          %v490 = vand.u32 2147483647, %v480
          %vm491 = vcmp.eq.f32.partialorder %v490, 8.507059e+37
          %v492 = vand.u32 %v480, 2147483648
          %v493 = vor.u32 1.1754944e-38, %v492
          %v494 = vsel %vm491, %v493, %v489
          %v495 = vmul.f32 %v463, %v494
          %496 = vst [vmem:[%s222] sm:$0xff] %v495
        $region48: #{tpu_custom_call.1} parent=31 // pred_fallthru
          _
        %s497 = sand.u32 %s111, 1
        %s498 = scalar_lea.sflag [#allocation5], %s497
        %s499 = sand.u32 %s111, 1
        %s500 = smul.addr %s499, 8
        %s501 = scalar_lea.vmem [#allocation8], %s500
        // Predicated region
        $region49: #{tpu_custom_call.1} parent=31 // pred_check
          %p502 = pneg %p121
        $region50: #{tpu_custom_call.1} parent=31 // pred_check_branch
          %504 = sbr.rel (%p502) target = $region52
        $region51: #{tpu_custom_call.1} parent=31 // pred_region
          %506 = vsyncadd %s498, 0
          %s507 = smul.addr %s25, 8
          %s508 = scalar_lea.hbm %s3, %s507
          %s510 = sshll.u32 %s501, 4
          %s511 = int_to_ptr.vmem [resolvable:$true] %s510
          %s512 = sshll.u32 %s508, 4
          %s513 = int_to_ptr.hbm [resolvable:$true] %s512
          %515 = dma.vmem_to_hbm [thread:$0]  %s511, 128, %s513, %s498
        $region52: #{tpu_custom_call.1} parent=31 // pred_fallthru
          _
      $region32: #{tpu_custom_call.1} parent=5 // pred_fallthru
        _
      %p516 = scmp.le.s32.totalorder 2, %s16
      // Predicated region
      $region53: #{tpu_custom_call.1} parent=5 // pred_check
        %p517 = pneg %p516
      $region54: #{tpu_custom_call.1} parent=5 // pred_check_branch
        %519 = sbr.rel (%p517) target = $region56
      $region55: #{tpu_custom_call.1} parent=5 // pred_region
        %s520 = ssub.s32 %s16, 2
        // Predicated region
        $region57: #{tpu_custom_call.1} parent=55 // pred_check
          %p521 = pneg %p127
        $region58: #{tpu_custom_call.1} parent=55 // pred_check_branch
          %523 = sbr.rel (%p521) target = $region60
        $region59: #{tpu_custom_call.1} parent=55 // pred_region
          %s524 = sand.u32 %s112, 1
          %s525 = scalar_lea.sflag [#allocation5], %s524
          %s526 = sand.u32 %s112, 1
          %s527 = smul.addr %s526, 8
          %s528 = scalar_lea.vmem [#allocation8], %s527
          %530 = dma.done %s525, 128
        $region60: #{tpu_custom_call.1} parent=55 // pred_fallthru
          _
      $region56: #{tpu_custom_call.1} parent=5 // pred_fallthru
        _
    $region6: #{tpu_custom_call.1} parent=1 // loop_footer
      %s20 = sadd.s32 1, %s16
    $region7: #{tpu_custom_call.1} parent=1 // loop_footer_branch
      %15 = sbr.rel target = $region3
    $region8: #{tpu_custom_call.1} parent=1 // loop_exit
      _
    %531 = vsyncpa [#allocation4], 1
    %s532 = scalar_lea.sflag [#allocation4], 1
    %533 = vsyncpa %s532, 1
    %534 = vsyncpa [#allocation7], 1
    %535 = vsyncpa [#allocation5], 1
    %s536 = scalar_lea.sflag [#allocation5], 1
    %537 = vsyncpa %s536, 1

</llo_original>
